<compile_context>
chip_gen: v7x
topology: tpu7x:2x2x1
jax: 0.10.0
libtpu: 0.0.40
codegen_flags: <defaults>
</compile_context>

<pallas_src>
import math

import jax
import jax.numpy as jnp
from jax.experimental import pallas as pl
from jax.experimental.pallas import tpu as pltpu

_GELU_C = math.sqrt(2.0 / math.pi)


def mlp_kernel(x_ref, w1_ref, b1_ref, w2_ref, b2_ref, o_ref, acc_ref):
    """One (row-tile, hidden-tile) grid step.

    x_ref  : (tm, C)  activation row tile (resident across the hidden axis)
    w1_ref : (C, th)  c_fc weight slice (stored in x @ W layout)
    b1_ref : (1, th)  c_fc bias slice
    w2_ref : (th, C)  c_proj weight slice
    b2_ref : (1, C)   c_proj bias
    o_ref  : (tm, C)  output tile (revisited across the hidden axis)
    acc_ref: (tm, C)  f32 accumulator scratch
    """
    j = pl.program_id(1)

    @pl.when(j == 0)
    def _():
        acc_ref[...] = jnp.zeros_like(acc_ref)

    # c_fc slice: (tm, C) @ (C, th) with f32 accumulation on the MXU.
    h = jnp.dot(x_ref[...], w1_ref[...], preferred_element_type=jnp.float32)
    h = h + b1_ref[...].astype(jnp.float32)

    # GELU, tanh approximation (matches nn.GELU(approximate='tanh')), in f32.
    # tanh goes to the EUP slot, so it overlaps with the MXU/VPU work.
    g = 0.5 * h * (1.0 + jnp.tanh(_GELU_C * (h + 0.044715 * h * h * h)))

    # c_proj slice: accumulate (tm, th) @ (th, C) into the f32 accumulator.
    acc_ref[...] += jnp.dot(g.astype(w2_ref.dtype), w2_ref[...],
                            preferred_element_type=jnp.float32)

    @pl.when(j == pl.num_programs(1) - 1)
    def _():
        o_ref[...] = (acc_ref[...]
                      + b2_ref[...].astype(jnp.float32)).astype(o_ref.dtype)


def _round_up(x, m):
    return (x + m - 1) // m * m


def _pick_hidden_tile(hidden, max_th):
    """Largest tile <= max_th that divides H and is lane-aligned (mult of 128)."""
    if hidden <= max_th:
        return hidden
    for th in (2048, 1536, 1024, 896, 768, 640, 512, 384, 256, 128):
        if th <= max_th and hidden % th == 0:
            return th
    # Fallback: keep full hidden dim resident (only hits odd, non-128-multiple H).
    return hidden


def mlp_forward(x, w1, b1, w2, b2, *, tm=512, max_th=1024, mxu_dtype=None):
    """GPT-2 MLP forward.

    x : (B, T, C)
    w1: (C, 4C)  == c_fc.weight.T      b1: (4C,) == c_fc.bias
    w2: (4C, C)  == c_proj.weight.T    b2: (C,)  == c_proj.bias
    mxu_dtype: optionally cast x/w1/w2 (e.g. jnp.bfloat16) for the MXU fast
               path; accumulation, GELU and output stay f32-accurate.
    """
    B, T, C = x.shape
    H = w1.shape[1]
    out_dtype = x.dtype
    M = B * T

    if mxu_dtype is not None:
        x = x.astype(mxu_dtype)
        w1 = w1.astype(mxu_dtype)
        w2 = w2.astype(mxu_dtype)

    # Row tile: MXU-shaped when possible, padded to a multiple of 8.
    assert tm % 8 == 0
    tm_eff = tm if M >= tm else _round_up(M, 8)
    M_pad = _round_up(M, tm_eff)

    x2d = x.reshape(M, C)
    if M_pad != M:
        x2d = jnp.pad(x2d, ((0, M_pad - M), (0, 0)))

    th = _pick_hidden_tile(H, max_th)
    grid = (M_pad // tm_eff, H // th)
    n_row_tiles = grid[0]

    b1_2d = b1.reshape(1, H)
    b2_2d = b2.reshape(1, C)

    # VMEM budget (double-buffered tiles + accumulator), with headroom.
    xb = jnp.dtype(x2d.dtype).itemsize
    wb = jnp.dtype(w1.dtype).itemsize
    ob = jnp.dtype(out_dtype).itemsize
    budget = (2 * tm_eff * C * xb              # x tiles
              + 2 * (C * th + th) * wb         # W1 + b1 slices
              + 2 * (th * C) * wb              # W2 slices
              + 2 * C * jnp.dtype(b2.dtype).itemsize
              + 2 * tm_eff * C * ob            # output tiles
              + tm_eff * C * 4)                # f32 accumulator
    vmem_limit = int(min(100 * 1024 * 1024,
                         max(32 * 1024 * 1024, int(budget * 1.25) + (4 << 20))))

    cost = pl.CostEstimate(
        flops=4 * M_pad * C * H,               # two matmuls, 2*M*C*H each
        transcendentals=M_pad * H,             # tanh in the GELU
        bytes_accessed=(M_pad * C * xb                          # x read once
                        + n_row_tiles * (C * H + H * C) * wb    # weights re-streamed
                        + n_row_tiles * (H + C) * 4             # biases
                        + M_pad * C * ob),                      # output write
    )

    out2d = pl.pallas_call(
        mlp_kernel,
        out_shape=jax.ShapeDtypeStruct((M_pad, C), out_dtype),
        grid_spec=pltpu.PrefetchScalarGridSpec(
            num_scalar_prefetch=0,
            grid=grid,
            in_specs=[
                pl.BlockSpec((tm_eff, C), lambda i, j: (i, 0)),  # x rows (resident over j)
                pl.BlockSpec((C, th), lambda i, j: (0, j)),      # W1 slice
                pl.BlockSpec((1, th), lambda i, j: (0, j)),      # b1 slice
                pl.BlockSpec((th, C), lambda i, j: (j, 0)),      # W2 slice
                pl.BlockSpec((1, C), lambda i, j: (0, 0)),       # b2
            ],
            out_specs=pl.BlockSpec((tm_eff, C), lambda i, j: (i, 0)),
            scratch_shapes=[pltpu.VMEM((tm_eff, C), jnp.float32)],
        ),
        compiler_params=pltpu.CompilerParams(
            dimension_semantics=("parallel", "arbitrary"),
            vmem_limit_bytes=vmem_limit,
        ),
        cost_estimate=cost,
    )(x2d, w1, b1_2d, w2, b2_2d)

    return out2d[:M].reshape(B, T, C)


def mlp_reference(x, w1, b1, w2, b2):
    h = x @ w1 + b1
    g = 0.5 * h * (1.0 + jnp.tanh(_GELU_C * (h + 0.044715 * h ** 3)))
    return g @ w2 + b2


def _make_inputs(key, B, T, C):
    H = 4 * C
    kx, kw1, kb1, kw2, kb2 = jax.random.split(key, 5)
    x = jax.random.normal(kx, (B, T, C), dtype=jnp.float32)
    lim1 = 1.0 / math.sqrt(C)
    lim2 = 1.0 / math.sqrt(H)
    w1 = jax.random.uniform(kw1, (C, H), jnp.float32, -lim1, lim1)  # c_fc.weight.T
    b1 = jax.random.uniform(kb1, (H,), jnp.float32, -lim1, lim1)    # c_fc.bias
    w2 = jax.random.uniform(kw2, (H, C), jnp.float32, -lim2, lim2)  # c_proj.weight.T
    b2 = jax.random.uniform(kb2, (C,), jnp.float32, -lim2, lim2)    # c_proj.bias
    return x, w1, b1, w2, b2


if __name__ == "__main__":
    key = jax.random.PRNGKey(0)
    k1, k2 = jax.random.split(key)

    # Test 1: small config (B=2, T=8, n_embd=128), f32 path, single grid step.
    x, w1, b1, w2, b2 = _make_inputs(k1, B=2, T=8, C=128)
    out = jax.block_until_ready(mlp_forward(x, w1, b1, w2, b2))
    ref = mlp_reference(x, w1, b1, w2, b2)
    assert out.shape == x.shape
    assert jnp.allclose(out, ref, atol=1e-4, rtol=1e-4)

    # Test 2: exercises row padding (M=288 -> 384 with tm=128, three row steps)
    # and the streamed hidden-dim reduction (H=1024, max_th=512 -> two h steps).
    x, w1, b1, w2, b2 = _make_inputs(k2, B=3, T=96, C=256)
    out = jax.block_until_ready(
        mlp_forward(x, w1, b1, w2, b2, tm=128, max_th=512))
    ref = mlp_reference(x, w1, b1, w2, b2)
    assert out.shape == x.shape
    assert jnp.allclose(out, ref, atol=5e-3, rtol=5e-3)

    # Test 3: bf16 MXU fast path (f32 accumulation / GELU), looser tolerance;
    # uses the default large row tile (M < tm -> single padded row tile).
    out_bf16 = jax.block_until_ready(
        mlp_forward(x, w1, b1, w2, b2, max_th=512, mxu_dtype=jnp.bfloat16))
    assert out_bf16.shape == x.shape
    assert jnp.allclose(out_bf16, ref, atol=8e-2, rtol=8e-2)

    print("KERNEL_OK")
</pallas_src>

<mosaic_0001>
module attributes {stable_mosaic.version = 11 : i64} {
  func.func @mlp_kernel(%arg0: i32, %arg1: i32, %arg2: memref<16x128xf32, #tpu.memory_space<vmem>>, %arg3: memref<128x512xf32, #tpu.memory_space<vmem>>, %arg4: memref<1x512xf32, #tpu.memory_space<vmem>>, %arg5: memref<512x128xf32, #tpu.memory_space<vmem>>, %arg6: memref<1x128xf32, #tpu.memory_space<vmem>>, %arg7: memref<16x128xf32, #tpu.memory_space<vmem>>, %arg8: memref<16x128xf32, #tpu.memory_space<vmem>>) attributes {dimension_semantics = [#tpu.dimension_semantics<parallel>, #tpu.dimension_semantics<arbitrary>], iteration_bounds = array<i64: 1, 1>, scalar_prefetch = 0 : i64, scratch_operands = 1 : i64, tpu.core_type = #tpu.core_type<tc>, window_params = [{transform_indices = @transform_0, window_bounds = array<i64: 16, 128>}, {transform_indices = @transform_1, window_bounds = array<i64: 128, 512>}, {transform_indices = @transform_2, window_bounds = array<i64: 1, 512>}, {transform_indices = @transform_3, window_bounds = array<i64: 512, 128>}, {pipeline_mode = #tpu.pipeline_mode<synchronous>, transform_indices = @transform_4, window_bounds = array<i64: 1, 128>}, {transform_indices = @transform_5, window_bounds = array<i64: 16, 128>}]} {
    %c0_i32 = arith.constant 0 : i32
    %0 = arith.cmpi eq, %arg1, %c0_i32 : i32
    %1 = arith.extui %0 : i1 to i32
    %c0_i32_0 = arith.constant 0 : i32
    %2 = arith.cmpi ne, %1, %c0_i32_0 : i32
    scf.if %2 {
      %cst_19 = arith.constant 0.000000e+00 : f32
      %30 = vector.broadcast %cst_19 : f32 to vector<16x128xf32>
      %c0_20 = arith.constant 0 : index
      %c0_21 = arith.constant 0 : index
      %31 = vector.load %arg8[%c0_20, %c0_21] : memref<16x128xf32, #tpu.memory_space<vmem>>, vector<16x128xf32>
      tpu.vector_store %arg8[%c0_20, %c0_21], %30 {strides = array<i32>} : memref<16x128xf32, #tpu.memory_space<vmem>>, vector<16x128xf32>,
    } else {
    }
    %c0 = arith.constant 0 : index
    %c0_1 = arith.constant 0 : index
    %3 = vector.load %arg2[%c0, %c0_1] : memref<16x128xf32, #tpu.memory_space<vmem>>, vector<16x128xf32>
    %c0_2 = arith.constant 0 : index
    %c0_3 = arith.constant 0 : index
    %4 = vector.load %arg3[%c0_2, %c0_3] : memref<128x512xf32, #tpu.memory_space<vmem>>, vector<128x512xf32>
    %cst = arith.constant dense<0.000000e+00> : vector<16x512xf32>
    %5 = tpu.matmul %3, %4, %cst {dimension_numbers = #tpu.dot_dimension_numbers<[1], [0], [0], [1], [0, 0, 1, 1], [], []>} : vector<16x128xf32>, vector<128x512xf32>, vector<16x512xf32> -> vector<16x512xf32>
    %c0_4 = arith.constant 0 : index
    %c0_5 = arith.constant 0 : index
    %6 = vector.load %arg4[%c0_4, %c0_5] : memref<1x512xf32, #tpu.memory_space<vmem>>, vector<1x512xf32>
    %7 = vector.broadcast %6 : vector<1x512xf32> to vector<16x512xf32>
    %8 = arith.addf %5, %7 : vector<16x512xf32>
    %cst_6 = arith.constant 5.000000e-01 : f32
    %9 = vector.broadcast %cst_6 : f32 to vector<16x512xf32>
    %10 = arith.mulf %9, %8 : vector<16x512xf32>
    %cst_7 = arith.constant 4.471500e-02 : f32
    %11 = vector.broadcast %cst_7 : f32 to vector<16x512xf32>
    %12 = arith.mulf %11, %8 : vector<16x512xf32>
    %13 = arith.mulf %12, %8 : vector<16x512xf32>
    %14 = arith.mulf %13, %8 : vector<16x512xf32>
    %15 = arith.addf %8, %14 : vector<16x512xf32>
    %cst_8 = arith.constant 0.797884583 : f32
    %16 = vector.broadcast %cst_8 : f32 to vector<16x512xf32>
    %17 = arith.mulf %16, %15 : vector<16x512xf32>
    %18 = math.tanh %17 : vector<16x512xf32>
    %cst_9 = arith.constant 1.000000e+00 : f32
    %19 = vector.broadcast %cst_9 : f32 to vector<16x512xf32>
    %20 = arith.addf %19, %18 : vector<16x512xf32>
    %21 = arith.mulf %10, %20 : vector<16x512xf32>
    %c0_10 = arith.constant 0 : index
    %c0_11 = arith.constant 0 : index
    %22 = vector.load %arg8[%c0_10, %c0_11] : memref<16x128xf32, #tpu.memory_space<vmem>>, vector<16x128xf32>
    %c0_12 = arith.constant 0 : index
    %c0_13 = arith.constant 0 : index
    %23 = vector.load %arg5[%c0_12, %c0_13] : memref<512x128xf32, #tpu.memory_space<vmem>>, vector<512x128xf32>
    %cst_14 = arith.constant dense<0.000000e+00> : vector<16x128xf32>
    %24 = tpu.matmul %21, %23, %cst_14 {dimension_numbers = #tpu.dot_dimension_numbers<[1], [0], [0], [1], [0, 0, 1, 1], [], []>} : vector<16x512xf32>, vector<512x128xf32>, vector<16x128xf32> -> vector<16x128xf32>
    %25 = arith.addf %22, %24 : vector<16x128xf32>
    %c0_15 = arith.constant 0 : index
    %c0_16 = arith.constant 0 : index
    %26 = vector.load %arg8[%c0_15, %c0_16] : memref<16x128xf32, #tpu.memory_space<vmem>>, vector<16x128xf32>
    tpu.vector_store %arg8[%c0_15, %c0_16], %25 {strides = array<i32>} : memref<16x128xf32, #tpu.memory_space<vmem>>, vector<16x128xf32>,
    %c0_i32_17 = arith.constant 0 : i32
    %27 = arith.cmpi eq, %arg1, %c0_i32_17 : i32
    %28 = arith.extui %27 : i1 to i32
    %c0_i32_18 = arith.constant 0 : i32
    %29 = arith.cmpi ne, %28, %c0_i32_18 : i32
    scf.if %29 {
      %c0_19 = arith.constant 0 : index
      %c0_20 = arith.constant 0 : index
      %30 = vector.load %arg8[%c0_19, %c0_20] : memref<16x128xf32, #tpu.memory_space<vmem>>, vector<16x128xf32>
      %c0_21 = arith.constant 0 : index
      %c0_22 = arith.constant 0 : index
      %31 = vector.load %arg6[%c0_21, %c0_22] : memref<1x128xf32, #tpu.memory_space<vmem>>, vector<1x128xf32>
      %32 = vector.broadcast %31 : vector<1x128xf32> to vector<16x128xf32>
      %33 = arith.addf %30, %32 : vector<16x128xf32>
      %c0_23 = arith.constant 0 : index
      %c0_24 = arith.constant 0 : index
      %34 = vector.load %arg7[%c0_23, %c0_24] : memref<16x128xf32, #tpu.memory_space<vmem>>, vector<16x128xf32>
      tpu.vector_store %arg7[%c0_23, %c0_24], %33 {strides = array<i32>} : memref<16x128xf32, #tpu.memory_space<vmem>>, vector<16x128xf32>,
    } else {
    }
    return
  }
  func.func @transform_0(%arg0: i32, %arg1: i32) -> (i32, i32) {
    %c0_i32 = arith.constant 0 : i32
    %c0_i32_0 = arith.constant 0 : i32
    return %arg0, %c0_i32 : i32, i32
  }
  func.func @transform_1(%arg0: i32, %arg1: i32) -> (i32, i32) {
    %c0_i32 = arith.constant 0 : i32
    %c0_i32_0 = arith.constant 0 : i32
    return %c0_i32, %arg1 : i32, i32
  }
  func.func @transform_2(%arg0: i32, %arg1: i32) -> (i32, i32) {
    %c0_i32 = arith.constant 0 : i32
    %c0_i32_0 = arith.constant 0 : i32
    return %c0_i32, %arg1 : i32, i32
  }
  func.func @transform_3(%arg0: i32, %arg1: i32) -> (i32, i32) {
    %c0_i32 = arith.constant 0 : i32
    %c0_i32_0 = arith.constant 0 : i32
    return %arg1, %c0_i32 : i32, i32
  }
  func.func @transform_4(%arg0: i32, %arg1: i32) -> (i32, i32) {
    %c0_i32 = arith.constant 0 : i32
    %c0_i32_0 = arith.constant 0 : i32
    %c0_i32_1 = arith.constant 0 : i32
    return %c0_i32, %c0_i32_0 : i32, i32
  }
  func.func @transform_5(%arg0: i32, %arg1: i32) -> (i32, i32) {
    %c0_i32 = arith.constant 0 : i32
    %c0_i32_0 = arith.constant 0 : i32
    return %arg0, %c0_i32 : i32, i32
  }
}

</mosaic_0001>

<llo_original>
// kernel: tpu_custom_call.1
$region0: #{tpu_custom_call.1}
  #allocation0 [shape = 'u32[]', space=smem, size = 0x4, offset = 0x4, fixed_abs, tag = 'smem constant byte address 0x4 - core index']
  #allocation1 [shape = 'u32[144,128]{1,0:T(1,128)}', space=vmem, size = 0x12000, scoped, tag = 'internal scratch']
  #allocation2 [shape = 'f32[16,128]{1,0:T(8,128)}', space=vmem, size = 0x2000, scoped, tag = 'scratch operand']
  %s0 = inlined_call_operand.hbm [shape: f32[16,128], index: 0, kind: input, shape index: {}]
  %s1 = inlined_call_operand.hbm [shape: f32[128,512], index: 1, kind: input, shape index: {}]
  %s2 = inlined_call_operand.vmem [shape: f32[1,512], index: 2, kind: input, shape index: {}]
  %s3 = inlined_call_operand.hbm [shape: f32[512,128], index: 3, kind: input, shape index: {}]
  %s4 = inlined_call_operand.vmem [shape: f32[1,128], index: 4, kind: input, shape index: {}]
  %s5 = inlined_call_operand.hbm [shape: f32[16,128], index: 5, kind: output, shape index: {}]
  %s6 = sld [smem:[#allocation0]]
  $region50: #{tpu_custom_call.1} parent=0
    _
  %s8 = ssub.s32 1, %s6
  %s9 = scalar_select 0, %s8, %s6
  $region1: #{tpu_custom_call.1} parent=0
    #allocation3 [shape = 'u8[8192]{0}', space=vmem, size = 0x2000, scoped, tag = 'input window, operand 0, single buffered']
    #allocation4 [shape = 's32[1]{0}', space=sflag, size = 0x4, scoped, tag = 'scoped memory for tpu_custom_call.1']
    #allocation5 [shape = 's32[1]{0}', space=sflag, size = 0x4, scoped, tag = 'scoped memory for tpu_custom_call.1']
    #allocation6 [shape = 'u8[262144]{0}', space=vmem, size = 0x40000, scoped, tag = 'input window, operand 1, single buffered']
    #allocation7 [shape = 's32[1]{0}', space=sflag, size = 0x4, scoped, tag = 'scoped memory for tpu_custom_call.1']
    #allocation8 [shape = 'u8[262144]{0}', space=vmem, size = 0x40000, scoped, tag = 'input window, operand 3, single buffered']
    #allocation9 [shape = 'u8[8192]{0}', space=vmem, size = 0x2000, scoped, tag = 'output window, operand 0, single buffered']
    %10 = vsyncpa [#allocation4], 0
    %11 = vsyncpa [#allocation7], 0
    %12 = vsyncpa [#allocation5], 0
    // Predicated region
    $region2: #{tpu_custom_call.1} parent=1 // pred_check
      _
    $region3: #{tpu_custom_call.1} parent=1 // pred_check_branch
      %14 = sbr.rel (0) target = $region5
    $region4: #{tpu_custom_call.1} parent=1 // pred_region
      %s16 = ssub.s32 256, 256
      %17 = vsyncadd [#allocation4], %s16
      %s18 = sshll.u32 [#allocation3], 4
      %s19 = int_to_ptr.vmem [resolvable:$true] %s18
      %24 = dma.hbm_to_vmem [thread:$0]  %s0, 256, %s19, [#allocation4], 128, 128, 8
    $region5: #{tpu_custom_call.1} parent=1 // pred_fallthru
      _
    // Predicated region
    $region6: #{tpu_custom_call.1} parent=1 // pred_check
      _
    $region7: #{tpu_custom_call.1} parent=1 // pred_check_branch
      %26 = sbr.rel (0) target = $region9
    $region8: #{tpu_custom_call.1} parent=1 // pred_region
      %s28 = ssub.s32 8192, 8192
      %29 = vsyncadd [#allocation7], %s28
      %s30 = sshll.u32 [#allocation6], 4
      %s31 = int_to_ptr.vmem [resolvable:$true] %s30
      %36 = dma.hbm_to_vmem [thread:$0]  %s1, 8192, %s31, [#allocation7], 512, 512, 32
    $region9: #{tpu_custom_call.1} parent=1 // pred_fallthru
      _
    // Predicated region
    $region10: #{tpu_custom_call.1} parent=1 // pred_check
      _
    $region11: #{tpu_custom_call.1} parent=1 // pred_check_branch
      %38 = sbr.rel (0) target = $region13
    $region12: #{tpu_custom_call.1} parent=1 // pred_region
      _
    $region13: #{tpu_custom_call.1} parent=1 // pred_fallthru
      _
    // Predicated region
    $region14: #{tpu_custom_call.1} parent=1 // pred_check
      _
    $region15: #{tpu_custom_call.1} parent=1 // pred_check_branch
      %40 = sbr.rel (0) target = $region17
    $region16: #{tpu_custom_call.1} parent=1 // pred_region
      %s42 = ssub.s32 8192, 8192
      %43 = vsyncadd [#allocation7], %s42
      %s44 = sshll.u32 [#allocation8], 4
      %s45 = int_to_ptr.vmem [resolvable:$true] %s44
      %50 = dma.hbm_to_vmem [thread:$0]  %s3, 8192, %s45, [#allocation7], 128, 128, 8
    $region17: #{tpu_custom_call.1} parent=1 // pred_fallthru
      _
    // Predicated region
    $region18: #{tpu_custom_call.1} parent=1 // pred_check
      _
    $region19: #{tpu_custom_call.1} parent=1 // pred_check_branch
      %52 = sbr.rel (0) target = $region21
    $region20: #{tpu_custom_call.1} parent=1 // pred_region
      _
    $region21: #{tpu_custom_call.1} parent=1 // pred_fallthru
      _
    // Predicated region
    $region22: #{tpu_custom_call.1} parent=1 // pred_check
      _
    $region23: #{tpu_custom_call.1} parent=1 // pred_check_branch
      %54 = sbr.rel (0) target = $region25
    $region24: #{tpu_custom_call.1} parent=1 // pred_region
      %55 = dma.done [#allocation4], 256
    $region25: #{tpu_custom_call.1} parent=1 // pred_fallthru
      _
    // Predicated region
    $region26: #{tpu_custom_call.1} parent=1 // pred_check
      _
    $region27: #{tpu_custom_call.1} parent=1 // pred_check_branch
      %57 = sbr.rel (0) target = $region29
    $region28: #{tpu_custom_call.1} parent=1 // pred_region
      %58 = dma.done [#allocation7], 8192
    $region29: #{tpu_custom_call.1} parent=1 // pred_fallthru
      _
    // Predicated region
    $region30: #{tpu_custom_call.1} parent=1 // pred_check
      _
    $region31: #{tpu_custom_call.1} parent=1 // pred_check_branch
      %60 = sbr.rel (0) target = $region33
    $region32: #{tpu_custom_call.1} parent=1 // pred_region
      %61 = dma.done [#allocation7], 8192
    $region33: #{tpu_custom_call.1} parent=1 // pred_fallthru
      _
    %p62 = scmp.eq.s32.totalorder 0, 0
    // Predicated region
    $region34: #{tpu_custom_call.1} parent=1 // pred_check
      %p63 = pneg %p62
    $region35: #{tpu_custom_call.1} parent=1 // pred_check_branch
      %65 = sbr.rel (%p63) target = $region37
    $region36: #{tpu_custom_call.1} parent=1 // pred_region
      %66 = vst [vmem:[#allocation2] sm:$0xff] 0.0
      %67 = vst [vmem:[#allocation2 + $0x8] sm:$0xff] 0.0
    $region37: #{tpu_custom_call.1} parent=1 // pred_fallthru
      _
    %v68 = vld [vmem:[#allocation3] sm:$0xff]
    %v69 = vld [vmem:[#allocation3 + $0x8] sm:$0xff]
    %v70 = vld [vmem:[#allocation6] sm:$0xff]
    %v71 = vld [vmem:[#allocation6 + $0x8] sm:$0xff]
    %v72 = vld [vmem:[#allocation6 + $0x10] sm:$0xff]
    %v73 = vld [vmem:[#allocation6 + $0x18] sm:$0xff]
    %v74 = vld [vmem:[#allocation6 + $0x20] sm:$0xff]
    %v75 = vld [vmem:[#allocation6 + $0x28] sm:$0xff]
    %v76 = vld [vmem:[#allocation6 + $0x30] sm:$0xff]
    %v77 = vld [vmem:[#allocation6 + $0x38] sm:$0xff]
    %v78 = vld [vmem:[#allocation6 + $0x40] sm:$0xff]
    %v79 = vld [vmem:[#allocation6 + $0x48] sm:$0xff]
    %v80 = vld [vmem:[#allocation6 + $0x50] sm:$0xff]
    %v81 = vld [vmem:[#allocation6 + $0x58] sm:$0xff]
    %v82 = vld [vmem:[#allocation6 + $0x60] sm:$0xff]
    %v83 = vld [vmem:[#allocation6 + $0x68] sm:$0xff]
    %v84 = vld [vmem:[#allocation6 + $0x70] sm:$0xff]
    %v85 = vld [vmem:[#allocation6 + $0x78] sm:$0xff]
    %v86 = vld [vmem:[#allocation6 + $0x80] sm:$0xff]
    %v87 = vld [vmem:[#allocation6 + $0x88] sm:$0xff]
    %v88 = vld [vmem:[#allocation6 + $0x90] sm:$0xff]
    %v89 = vld [vmem:[#allocation6 + $0x98] sm:$0xff]
    %v90 = vld [vmem:[#allocation6 + $0xa0] sm:$0xff]
    %v91 = vld [vmem:[#allocation6 + $0xa8] sm:$0xff]
    %v92 = vld [vmem:[#allocation6 + $0xb0] sm:$0xff]
    %v93 = vld [vmem:[#allocation6 + $0xb8] sm:$0xff]
    %v94 = vld [vmem:[#allocation6 + $0xc0] sm:$0xff]
    %v95 = vld [vmem:[#allocation6 + $0xc8] sm:$0xff]
    %v96 = vld [vmem:[#allocation6 + $0xd0] sm:$0xff]
    %v97 = vld [vmem:[#allocation6 + $0xd8] sm:$0xff]
    %v98 = vld [vmem:[#allocation6 + $0xe0] sm:$0xff]
    %v99 = vld [vmem:[#allocation6 + $0xe8] sm:$0xff]
    %v100 = vld [vmem:[#allocation6 + $0xf0] sm:$0xff]
    %v101 = vld [vmem:[#allocation6 + $0xf8] sm:$0xff]
    %v102 = vld [vmem:[#allocation6 + $0x100] sm:$0xff]
    %v103 = vld [vmem:[#allocation6 + $0x108] sm:$0xff]
    %v104 = vld [vmem:[#allocation6 + $0x110] sm:$0xff]
    %v105 = vld [vmem:[#allocation6 + $0x118] sm:$0xff]
    %v106 = vld [vmem:[#allocation6 + $0x120] sm:$0xff]
    %v107 = vld [vmem:[#allocation6 + $0x128] sm:$0xff]
    %v108 = vld [vmem:[#allocation6 + $0x130] sm:$0xff]
    %v109 = vld [vmem:[#allocation6 + $0x138] sm:$0xff]
    %v110 = vld [vmem:[#allocation6 + $0x140] sm:$0xff]
    %v111 = vld [vmem:[#allocation6 + $0x148] sm:$0xff]
    %v112 = vld [vmem:[#allocation6 + $0x150] sm:$0xff]
    %v113 = vld [vmem:[#allocation6 + $0x158] sm:$0xff]
    %v114 = vld [vmem:[#allocation6 + $0x160] sm:$0xff]
    %v115 = vld [vmem:[#allocation6 + $0x168] sm:$0xff]
    %v116 = vld [vmem:[#allocation6 + $0x170] sm:$0xff]
    %v117 = vld [vmem:[#allocation6 + $0x178] sm:$0xff]
    %v118 = vld [vmem:[#allocation6 + $0x180] sm:$0xff]
    %v119 = vld [vmem:[#allocation6 + $0x188] sm:$0xff]
    %v120 = vld [vmem:[#allocation6 + $0x190] sm:$0xff]
    %v121 = vld [vmem:[#allocation6 + $0x198] sm:$0xff]
    %v122 = vld [vmem:[#allocation6 + $0x1a0] sm:$0xff]
    %v123 = vld [vmem:[#allocation6 + $0x1a8] sm:$0xff]
    %v124 = vld [vmem:[#allocation6 + $0x1b0] sm:$0xff]
    %v125 = vld [vmem:[#allocation6 + $0x1b8] sm:$0xff]
    %v126 = vld [vmem:[#allocation6 + $0x1c0] sm:$0xff]
    %v127 = vld [vmem:[#allocation6 + $0x1c8] sm:$0xff]
    %v128 = vld [vmem:[#allocation6 + $0x1d0] sm:$0xff]
    %v129 = vld [vmem:[#allocation6 + $0x1d8] sm:$0xff]
    %v130 = vld [vmem:[#allocation6 + $0x1e0] sm:$0xff]
    %v131 = vld [vmem:[#allocation6 + $0x1e8] sm:$0xff]
    %v132 = vld [vmem:[#allocation6 + $0x1f0] sm:$0xff]
    %v133 = vld [vmem:[#allocation6 + $0x1f8] sm:$0xff]
    %v134 = vld [vmem:[%s2] sm:$0xf]
    %v136 = vlaneseq
    %v137 = vshrl.u32 %v136, 7
    %v138 = vsub.s32 0, %v137
    %v139 = vrot.slane %v134, %v138
    %v140 = vlaneseq
    %v141 = vshrl.u32 %v140, 7
    %v142 = vsub.s32 1, %v141
    %v143 = vrot.slane %v134, %v142
    %v144 = vlaneseq
    %v145 = vshrl.u32 %v144, 7
    %v146 = vsub.s32 2, %v145
    %v147 = vrot.slane %v134, %v146
    %v148 = vlaneseq
    %v149 = vshrl.u32 %v148, 7
    %v150 = vsub.s32 3, %v149
    %v151 = vrot.slane %v134, %v150
    %156 = vmatprep.subr.mxu0 %v71
    %157 = vmatpush1.msra.mxu0 %v70
    %158 = vmatprep.subr.mxu0 %v75
    %159 = vmatpush1.msra.mxu0 %v74
    %160 = vmatprep.subr.mxu0 %v79
    %161 = vmatpush1.msra.mxu0 %v78
    %162 = vmatprep.subr.mxu0 %v83
    %163 = vmatpush1.msra.mxu0 %v82
    %164 = vmatprep.subr.mxu0 %v87
    %165 = vmatpush1.msra.mxu0 %v86
    %166 = vmatprep.subr.mxu0 %v91
    %167 = vmatpush1.msra.mxu0 %v90
    %168 = vmatprep.subr.mxu0 %v95
    %169 = vmatpush1.msra.mxu0 %v94
    %170 = vmatprep.subr.mxu0 %v99
    %171 = vmatpush1.msra.mxu0 %v98
    %172 = vmatprep.subr.mxu0 %v103
    %173 = vmatpush1.msra.mxu0 %v102
    %174 = vmatprep.subr.mxu0 %v107
    %175 = vmatpush1.msra.mxu0 %v106
    %176 = vmatprep.subr.mxu0 %v111
    %177 = vmatpush1.msra.mxu0 %v110
    %178 = vmatprep.subr.mxu0 %v115
    %179 = vmatpush1.msra.mxu0 %v114
    %180 = vmatprep.subr.mxu0 %v119
    %181 = vmatpush1.msra.mxu0 %v118
    %182 = vmatprep.subr.mxu0 %v123
    %183 = vmatpush1.msra.mxu0 %v122
    %184 = vmatprep.subr.mxu0 %v127
    %185 = vmatpush1.msra.mxu0 %v126
    %186 = vmatprep.subr.mxu0 %v131
    %187 = vmatpush1.msra.mxu0 %v130
    %188 = vmatprep.subr.mxu0 0.0
    %189 = vmatpush1.msra.mxu0 0.0
    %190 = vmatprep.subr.mxu0 0.0
    %191 = vmatpush1.msra.mxu0 0.0
    %192 = vmatprep.subr.mxu0 0.0
    %193 = vmatpush1.msra.mxu0 0.0
    %194 = vmatprep.subr.mxu0 0.0
    %195 = vmatpush1.msra.mxu0 0.0
    %196 = vmatprep.subr.mxu0 0.0
    %197 = vmatpush1.msra.mxu0 0.0
    %198 = vmatprep.subr.mxu0 0.0
    %199 = vmatpush1.msra.mxu0 0.0
    %200 = vmatprep.subr.mxu0 0.0
    %201 = vmatpush1.msra.mxu0 0.0
    %202 = vmatprep.subr.mxu0 0.0
    %203 = vmatpush1.msra.mxu0 0.0
    %204 = vmatprep.subr.mxu0 0.0
    %205 = vmatpush1.msra.mxu0 0.0
    %206 = vmatprep.subr.mxu0 0.0
    %207 = vmatpush1.msra.mxu0 0.0
    %208 = vmatprep.subr.mxu0 0.0
    %209 = vmatpush1.msra.mxu0 0.0
    %210 = vmatprep.subr.mxu0 0.0
    %211 = vmatpush1.msra.mxu0 0.0
    %212 = vmatprep.subr.mxu0 0.0
    %213 = vmatpush1.msra.mxu0 0.0
    %214 = vmatprep.subr.mxu0 0.0
    %215 = vmatpush1.msra.mxu0 0.0
    %216 = vmatprep.subr.mxu0 0.0
    %217 = vmatpush1.msra.mxu0 0.0
    %218 = vmatprep.subr.mxu0 0.0
    %219 = vmatpush1.msra.mxu0 0.0
    %220 = vmatprep.mubr.f32.mxu0 0.0
    %221 = vmatmul.mubr.f32.gmra.mrb[0].mxu0 %v68
    %v222 = vpop.f32.mrb[0].mxu0
    %v223 = vadd.f32 %v139, %v222
    %v224 = vpop.f32.mrb[0].mxu0
    %v225 = vadd.f32 %v143, %v224
    %226 = vmatprep.mubr.f32.mxu0 0.0
    %227 = vmatmul.mubr.f32.gmra.mrb[0].mxu0 %v69
    %v228 = vpop.f32.mrb[0].mxu0
    %v229 = vadd.f32 %v139, %v228
    %v230 = vpop.f32.mrb[0].mxu0
    %v231 = vadd.f32 %v143, %v230
    %232 = vdwg.mxu0
    %233 = vmatprep.subr.mxu0 %v73
    %234 = vmatpush1.msra.mxu0 %v72
    %235 = vmatprep.subr.mxu0 %v77
    %236 = vmatpush1.msra.mxu0 %v76
    %237 = vmatprep.subr.mxu0 %v81
    %238 = vmatpush1.msra.mxu0 %v80
    %239 = vmatprep.subr.mxu0 %v85
    %240 = vmatpush1.msra.mxu0 %v84
    %241 = vmatprep.subr.mxu0 %v89
    %242 = vmatpush1.msra.mxu0 %v88
    %243 = vmatprep.subr.mxu0 %v93
    %244 = vmatpush1.msra.mxu0 %v92
    %245 = vmatprep.subr.mxu0 %v97
    %246 = vmatpush1.msra.mxu0 %v96
    %247 = vmatprep.subr.mxu0 %v101
    %248 = vmatpush1.msra.mxu0 %v100
    %249 = vmatprep.subr.mxu0 %v105
    %250 = vmatpush1.msra.mxu0 %v104
    %251 = vmatprep.subr.mxu0 %v109
    %252 = vmatpush1.msra.mxu0 %v108
    %253 = vmatprep.subr.mxu0 %v113
    %254 = vmatpush1.msra.mxu0 %v112
    %255 = vmatprep.subr.mxu0 %v117
    %256 = vmatpush1.msra.mxu0 %v116
    %257 = vmatprep.subr.mxu0 %v121
    %258 = vmatpush1.msra.mxu0 %v120
    %259 = vmatprep.subr.mxu0 %v125
    %260 = vmatpush1.msra.mxu0 %v124
    %261 = vmatprep.subr.mxu0 %v129
    %262 = vmatpush1.msra.mxu0 %v128
    %263 = vmatprep.subr.mxu0 %v133
    %264 = vmatpush1.msra.mxu0 %v132
    %265 = vmatprep.subr.mxu0 0.0
    %266 = vmatpush1.msra.mxu0 0.0
    %267 = vmatprep.subr.mxu0 0.0
    %268 = vmatpush1.msra.mxu0 0.0
    %269 = vmatprep.subr.mxu0 0.0
    %270 = vmatpush1.msra.mxu0 0.0
    %271 = vmatprep.subr.mxu0 0.0
    %272 = vmatpush1.msra.mxu0 0.0
    %273 = vmatprep.subr.mxu0 0.0
    %274 = vmatpush1.msra.mxu0 0.0
    %275 = vmatprep.subr.mxu0 0.0
    %276 = vmatpush1.msra.mxu0 0.0
    %277 = vmatprep.subr.mxu0 0.0
    %278 = vmatpush1.msra.mxu0 0.0
    %279 = vmatprep.subr.mxu0 0.0
    %280 = vmatpush1.msra.mxu0 0.0
    %281 = vmatprep.subr.mxu0 0.0
    %282 = vmatpush1.msra.mxu0 0.0
    %283 = vmatprep.subr.mxu0 0.0
    %284 = vmatpush1.msra.mxu0 0.0
    %285 = vmatprep.subr.mxu0 0.0
    %286 = vmatpush1.msra.mxu0 0.0
    %287 = vmatprep.subr.mxu0 0.0
    %288 = vmatpush1.msra.mxu0 0.0
    %289 = vmatprep.subr.mxu0 0.0
    %290 = vmatpush1.msra.mxu0 0.0
    %291 = vmatprep.subr.mxu0 0.0
    %292 = vmatpush1.msra.mxu0 0.0
    %293 = vmatprep.subr.mxu0 0.0
    %294 = vmatpush1.msra.mxu0 0.0
    %295 = vmatprep.subr.mxu0 0.0
    %296 = vmatpush1.msra.mxu0 0.0
    %297 = vmatprep.mubr.f32.mxu0 0.0
    %298 = vmatmul.mubr.f32.gmra.mrb[0].mxu0 %v68
    %v299 = vpop.f32.mrb[0].mxu0
    %v300 = vadd.f32 %v147, %v299
    %v301 = vpop.f32.mrb[0].mxu0
    %v302 = vadd.f32 %v151, %v301
    %303 = vmatprep.mubr.f32.mxu0 0.0
    %304 = vmatmul.mubr.f32.gmra.mrb[0].mxu0 %v69
    %v305 = vpop.f32.mrb[0].mxu0
    %v306 = vadd.f32 %v147, %v305
    %v307 = vpop.f32.mrb[0].mxu0
    %v308 = vadd.f32 %v151, %v307
    %309 = vdwg.mxu0
    %v310 = vmul.f32 %v223, 0.5
    %v311 = vmul.f32 %v225, 0.5
    %v312 = vmul.f32 %v300, 0.5
    %v313 = vmul.f32 %v302, 0.5
    %v314 = vmul.f32 %v229, 0.5
    %v315 = vmul.f32 %v231, 0.5
    %v316 = vmul.f32 %v306, 0.5
    %v317 = vmul.f32 %v308, 0.5
    %v318 = vmul.f32 %v223, 0.044715
    %v319 = vmul.f32 %v225, 0.044715
    %v320 = vmul.f32 %v300, 0.044715
    %v321 = vmul.f32 %v302, 0.044715
    %v322 = vmul.f32 %v229, 0.044715
    %v323 = vmul.f32 %v231, 0.044715
    %v324 = vmul.f32 %v306, 0.044715
    %v325 = vmul.f32 %v308, 0.044715
    %v326 = vmul.f32 %v318, %v223
    %v327 = vmul.f32 %v319, %v225
    %v328 = vmul.f32 %v320, %v300
    %v329 = vmul.f32 %v321, %v302
    %v330 = vmul.f32 %v322, %v229
    %v331 = vmul.f32 %v323, %v231
    %v332 = vmul.f32 %v324, %v306
    %v333 = vmul.f32 %v325, %v308
    %v334 = vmul.f32 %v326, %v223
    %v335 = vmul.f32 %v327, %v225
    %v336 = vmul.f32 %v328, %v300
    %v337 = vmul.f32 %v329, %v302
    %v338 = vmul.f32 %v330, %v229
    %v339 = vmul.f32 %v331, %v231
    %v340 = vmul.f32 %v332, %v306
    %v341 = vmul.f32 %v333, %v308
    %v342 = vadd.f32 %v223, %v334
    %v343 = vadd.f32 %v225, %v335
    %v344 = vadd.f32 %v300, %v336
    %v345 = vadd.f32 %v302, %v337
    %v346 = vadd.f32 %v229, %v338
    %v347 = vadd.f32 %v231, %v339
    %v348 = vadd.f32 %v306, %v340
    %v349 = vadd.f32 %v308, %v341
    %v350 = vmul.f32 %v342, 0.7978846
    %v351 = vmul.f32 %v343, 0.7978846
    %v352 = vmul.f32 %v344, 0.7978846
    %v353 = vmul.f32 %v345, 0.7978846
    %v354 = vmul.f32 %v346, 0.7978846
    %v355 = vmul.f32 %v347, 0.7978846
    %v356 = vmul.f32 %v348, 0.7978846
    %v357 = vmul.f32 %v349, 0.7978846
    %v358 = vtanh.pop %v350
    %v359 = vtanh.pop %v351
    %v360 = vtanh.pop %v352
    %v361 = vtanh.pop %v353
    %v362 = vtanh.pop %v354
    %v363 = vtanh.pop %v355
    %v364 = vtanh.pop %v356
    %v365 = vtanh.pop %v357
    %v366 = vadd.f32 %v358, 1.0
    %v367 = vadd.f32 %v359, 1.0
    %v368 = vadd.f32 %v360, 1.0
    %v369 = vadd.f32 %v361, 1.0
    %v370 = vadd.f32 %v362, 1.0
    %v371 = vadd.f32 %v363, 1.0
    %v372 = vadd.f32 %v364, 1.0
    %v373 = vadd.f32 %v365, 1.0
    %v374 = vmul.f32 %v310, %v366
    %v375 = vmul.f32 %v311, %v367
    %v376 = vmul.f32 %v312, %v368
    %v377 = vmul.f32 %v313, %v369
    %v378 = vmul.f32 %v314, %v370
    %v379 = vmul.f32 %v315, %v371
    %v380 = vmul.f32 %v316, %v372
    %v381 = vmul.f32 %v317, %v373
    %v382 = vld [vmem:[#allocation2] sm:$0xff]
    %v383 = vld [vmem:[#allocation2 + $0x8] sm:$0xff]
    %v384 = vld [vmem:[#allocation8] sm:$0xff]
    %v385 = vld [vmem:[#allocation8 + $0x8] sm:$0xff]
    %v386 = vld [vmem:[#allocation8 + $0x10] sm:$0xff]
    %v387 = vld [vmem:[#allocation8 + $0x18] sm:$0xff]
    %v388 = vld [vmem:[#allocation8 + $0x20] sm:$0xff]
    %v389 = vld [vmem:[#allocation8 + $0x28] sm:$0xff]
    %v390 = vld [vmem:[#allocation8 + $0x30] sm:$0xff]
    %v391 = vld [vmem:[#allocation8 + $0x38] sm:$0xff]
    %v392 = vld [vmem:[#allocation8 + $0x40] sm:$0xff]
    %v393 = vld [vmem:[#allocation8 + $0x48] sm:$0xff]
    %v394 = vld [vmem:[#allocation8 + $0x50] sm:$0xff]
    %v395 = vld [vmem:[#allocation8 + $0x58] sm:$0xff]
    %v396 = vld [vmem:[#allocation8 + $0x60] sm:$0xff]
    %v397 = vld [vmem:[#allocation8 + $0x68] sm:$0xff]
    %v398 = vld [vmem:[#allocation8 + $0x70] sm:$0xff]
    %v399 = vld [vmem:[#allocation8 + $0x78] sm:$0xff]
    %v400 = vld [vmem:[#allocation8 + $0x80] sm:$0xff]
    %v401 = vld [vmem:[#allocation8 + $0x88] sm:$0xff]
    %v402 = vld [vmem:[#allocation8 + $0x90] sm:$0xff]
    %v403 = vld [vmem:[#allocation8 + $0x98] sm:$0xff]
    %v404 = vld [vmem:[#allocation8 + $0xa0] sm:$0xff]
    %v405 = vld [vmem:[#allocation8 + $0xa8] sm:$0xff]
    %v406 = vld [vmem:[#allocation8 + $0xb0] sm:$0xff]
    %v407 = vld [vmem:[#allocation8 + $0xb8] sm:$0xff]
    %v408 = vld [vmem:[#allocation8 + $0xc0] sm:$0xff]
    %v409 = vld [vmem:[#allocation8 + $0xc8] sm:$0xff]
    %v410 = vld [vmem:[#allocation8 + $0xd0] sm:$0xff]
    %v411 = vld [vmem:[#allocation8 + $0xd8] sm:$0xff]
    %v412 = vld [vmem:[#allocation8 + $0xe0] sm:$0xff]
    %v413 = vld [vmem:[#allocation8 + $0xe8] sm:$0xff]
    %v414 = vld [vmem:[#allocation8 + $0xf0] sm:$0xff]
    %v415 = vld [vmem:[#allocation8 + $0xf8] sm:$0xff]
    %v416 = vld [vmem:[#allocation8 + $0x100] sm:$0xff]
    %v417 = vld [vmem:[#allocation8 + $0x108] sm:$0xff]
    %v418 = vld [vmem:[#allocation8 + $0x110] sm:$0xff]
    %v419 = vld [vmem:[#allocation8 + $0x118] sm:$0xff]
    %v420 = vld [vmem:[#allocation8 + $0x120] sm:$0xff]
    %v421 = vld [vmem:[#allocation8 + $0x128] sm:$0xff]
    %v422 = vld [vmem:[#allocation8 + $0x130] sm:$0xff]
    %v423 = vld [vmem:[#allocation8 + $0x138] sm:$0xff]
    %v424 = vld [vmem:[#allocation8 + $0x140] sm:$0xff]
    %v425 = vld [vmem:[#allocation8 + $0x148] sm:$0xff]
    %v426 = vld [vmem:[#allocation8 + $0x150] sm:$0xff]
    %v427 = vld [vmem:[#allocation8 + $0x158] sm:$0xff]
    %v428 = vld [vmem:[#allocation8 + $0x160] sm:$0xff]
    %v429 = vld [vmem:[#allocation8 + $0x168] sm:$0xff]
    %v430 = vld [vmem:[#allocation8 + $0x170] sm:$0xff]
    %v431 = vld [vmem:[#allocation8 + $0x178] sm:$0xff]
    %v432 = vld [vmem:[#allocation8 + $0x180] sm:$0xff]
    %v433 = vld [vmem:[#allocation8 + $0x188] sm:$0xff]
    %v434 = vld [vmem:[#allocation8 + $0x190] sm:$0xff]
    %v435 = vld [vmem:[#allocation8 + $0x198] sm:$0xff]
    %v436 = vld [vmem:[#allocation8 + $0x1a0] sm:$0xff]
    %v437 = vld [vmem:[#allocation8 + $0x1a8] sm:$0xff]
    %v438 = vld [vmem:[#allocation8 + $0x1b0] sm:$0xff]
    %v439 = vld [vmem:[#allocation8 + $0x1b8] sm:$0xff]
    %v440 = vld [vmem:[#allocation8 + $0x1c0] sm:$0xff]
    %v441 = vld [vmem:[#allocation8 + $0x1c8] sm:$0xff]
    %v442 = vld [vmem:[#allocation8 + $0x1d0] sm:$0xff]
    %v443 = vld [vmem:[#allocation8 + $0x1d8] sm:$0xff]
    %v444 = vld [vmem:[#allocation8 + $0x1e0] sm:$0xff]
    %v445 = vld [vmem:[#allocation8 + $0x1e8] sm:$0xff]
    %v446 = vld [vmem:[#allocation8 + $0x1f0] sm:$0xff]
    %v447 = vld [vmem:[#allocation8 + $0x1f8] sm:$0xff]
    %448 = vmatprep.subr.mxu0 0.0
    %449 = vmatpush1.msra.mxu0 %v384
    %450 = vmatprep.subr.mxu0 0.0
    %451 = vmatpush1.msra.mxu0 %v385
    %452 = vmatprep.subr.mxu0 0.0
    %453 = vmatpush1.msra.mxu0 %v386
    %454 = vmatprep.subr.mxu0 0.0
    %455 = vmatpush1.msra.mxu0 %v387
    %456 = vmatprep.subr.mxu0 0.0
    %457 = vmatpush1.msra.mxu0 %v388
    %458 = vmatprep.subr.mxu0 0.0
    %459 = vmatpush1.msra.mxu0 %v389
    %460 = vmatprep.subr.mxu0 0.0
    %461 = vmatpush1.msra.mxu0 %v390
    %462 = vmatprep.subr.mxu0 0.0
    %463 = vmatpush1.msra.mxu0 %v391
    %464 = vmatprep.subr.mxu0 0.0
    %465 = vmatpush1.msra.mxu0 %v392
    %466 = vmatprep.subr.mxu0 0.0
    %467 = vmatpush1.msra.mxu0 %v393
    %468 = vmatprep.subr.mxu0 0.0
    %469 = vmatpush1.msra.mxu0 %v394
    %470 = vmatprep.subr.mxu0 0.0
    %471 = vmatpush1.msra.mxu0 %v395
    %472 = vmatprep.subr.mxu0 0.0
    %473 = vmatpush1.msra.mxu0 %v396
    %474 = vmatprep.subr.mxu0 0.0
    %475 = vmatpush1.msra.mxu0 %v397
    %476 = vmatprep.subr.mxu0 0.0
    %477 = vmatpush1.msra.mxu0 %v398
    %478 = vmatprep.subr.mxu0 0.0
    %479 = vmatpush1.msra.mxu0 %v399
    %480 = vmatprep.subr.mxu0 0.0
    %481 = vmatpush1.msra.mxu0 %v400
    %482 = vmatprep.subr.mxu0 0.0
    %483 = vmatpush1.msra.mxu0 %v401
    %484 = vmatprep.subr.mxu0 0.0
    %485 = vmatpush1.msra.mxu0 %v402
    %486 = vmatprep.subr.mxu0 0.0
    %487 = vmatpush1.msra.mxu0 %v403
    %488 = vmatprep.subr.mxu0 0.0
    %489 = vmatpush1.msra.mxu0 %v404
    %490 = vmatprep.subr.mxu0 0.0
    %491 = vmatpush1.msra.mxu0 %v405
    %492 = vmatprep.subr.mxu0 0.0
    %493 = vmatpush1.msra.mxu0 %v406
    %494 = vmatprep.subr.mxu0 0.0
    %495 = vmatpush1.msra.mxu0 %v407
    %496 = vmatprep.subr.mxu0 0.0
    %497 = vmatpush1.msra.mxu0 %v408
    %498 = vmatprep.subr.mxu0 0.0
    %499 = vmatpush1.msra.mxu0 %v409
    %500 = vmatprep.subr.mxu0 0.0
    %501 = vmatpush1.msra.mxu0 %v410
    %502 = vmatprep.subr.mxu0 0.0
    %503 = vmatpush1.msra.mxu0 %v411
    %504 = vmatprep.subr.mxu0 0.0
    %505 = vmatpush1.msra.mxu0 %v412
    %506 = vmatprep.subr.mxu0 0.0
    %507 = vmatpush1.msra.mxu0 %v413
    %508 = vmatprep.subr.mxu0 0.0
    %509 = vmatpush1.msra.mxu0 %v414
    %510 = vmatprep.subr.mxu0 0.0
    %511 = vmatpush1.msra.mxu0 %v415
    %512 = vmatprep.mubr.f32.mxu0 %v375
    %513 = vmatmul.mubr.f32.gmra.mrb[0].mxu0 %v374
    %v514 = vpop.f32.mrb[0].mxu0
    %v515 = vadd.f32 0.0, %v514
    %v516 = vpop.f32.mrb[0].mxu0
    %517 = vmatprep.mubr.f32.mxu0 %v379
    %518 = vmatmul.mubr.f32.gmra.mrb[0].mxu0 %v378
    %v519 = vpop.f32.mrb[0].mxu0
    %v520 = vadd.f32 0.0, %v519
    %v521 = vpop.f32.mrb[0].mxu0
    %522 = vdwg.mxu0
    %523 = vmatprep.subr.mxu0 0.0
    %524 = vmatpush1.msra.mxu0 %v416
    %525 = vmatprep.subr.mxu0 0.0
    %526 = vmatpush1.msra.mxu0 %v417
    %527 = vmatprep.subr.mxu0 0.0
    %528 = vmatpush1.msra.mxu0 %v418
    %529 = vmatprep.subr.mxu0 0.0
    %530 = vmatpush1.msra.mxu0 %v419
    %531 = vmatprep.subr.mxu0 0.0
    %532 = vmatpush1.msra.mxu0 %v420
    %533 = vmatprep.subr.mxu0 0.0
    %534 = vmatpush1.msra.mxu0 %v421
    %535 = vmatprep.subr.mxu0 0.0
    %536 = vmatpush1.msra.mxu0 %v422
    %537 = vmatprep.subr.mxu0 0.0
    %538 = vmatpush1.msra.mxu0 %v423
    %539 = vmatprep.subr.mxu0 0.0
    %540 = vmatpush1.msra.mxu0 %v424
    %541 = vmatprep.subr.mxu0 0.0
    %542 = vmatpush1.msra.mxu0 %v425
    %543 = vmatprep.subr.mxu0 0.0
    %544 = vmatpush1.msra.mxu0 %v426
    %545 = vmatprep.subr.mxu0 0.0
    %546 = vmatpush1.msra.mxu0 %v427
    %547 = vmatprep.subr.mxu0 0.0
    %548 = vmatpush1.msra.mxu0 %v428
    %549 = vmatprep.subr.mxu0 0.0
    %550 = vmatpush1.msra.mxu0 %v429
    %551 = vmatprep.subr.mxu0 0.0
    %552 = vmatpush1.msra.mxu0 %v430
    %553 = vmatprep.subr.mxu0 0.0
    %554 = vmatpush1.msra.mxu0 %v431
    %555 = vmatprep.subr.mxu0 0.0
    %556 = vmatpush1.msra.mxu0 %v432
    %557 = vmatprep.subr.mxu0 0.0
    %558 = vmatpush1.msra.mxu0 %v433
    %559 = vmatprep.subr.mxu0 0.0
    %560 = vmatpush1.msra.mxu0 %v434
    %561 = vmatprep.subr.mxu0 0.0
    %562 = vmatpush1.msra.mxu0 %v435
    %563 = vmatprep.subr.mxu0 0.0
    %564 = vmatpush1.msra.mxu0 %v436
    %565 = vmatprep.subr.mxu0 0.0
    %566 = vmatpush1.msra.mxu0 %v437
    %567 = vmatprep.subr.mxu0 0.0
    %568 = vmatpush1.msra.mxu0 %v438
    %569 = vmatprep.subr.mxu0 0.0
    %570 = vmatpush1.msra.mxu0 %v439
    %571 = vmatprep.subr.mxu0 0.0
    %572 = vmatpush1.msra.mxu0 %v440
    %573 = vmatprep.subr.mxu0 0.0
    %574 = vmatpush1.msra.mxu0 %v441
    %575 = vmatprep.subr.mxu0 0.0
    %576 = vmatpush1.msra.mxu0 %v442
    %577 = vmatprep.subr.mxu0 0.0
    %578 = vmatpush1.msra.mxu0 %v443
    %579 = vmatprep.subr.mxu0 0.0
    %580 = vmatpush1.msra.mxu0 %v444
    %581 = vmatprep.subr.mxu0 0.0
    %582 = vmatpush1.msra.mxu0 %v445
    %583 = vmatprep.subr.mxu0 0.0
    %584 = vmatpush1.msra.mxu0 %v446
    %585 = vmatprep.subr.mxu0 0.0
    %586 = vmatpush1.msra.mxu0 %v447
    %587 = vmatprep.mubr.f32.mxu0 %v377
    %588 = vmatmul.mubr.f32.gmra.mrb[0].mxu0 %v376
    %v589 = vpop.f32.mrb[0].mxu0
    %v590 = vadd.f32 %v515, %v589
    %v591 = vpop.f32.mrb[0].mxu0
    %592 = vmatprep.mubr.f32.mxu0 %v381
    %593 = vmatmul.mubr.f32.gmra.mrb[0].mxu0 %v380
    %v594 = vpop.f32.mrb[0].mxu0
    %v595 = vadd.f32 %v520, %v594
    %v596 = vpop.f32.mrb[0].mxu0
    %597 = vdwg.mxu0
    %v598 = vadd.f32 %v382, %v590
    %v599 = vadd.f32 %v383, %v595
    %600 = vst [vmem:[#allocation2] sm:$0xff] %v598
    %601 = vst [vmem:[#allocation2 + $0x8] sm:$0xff] %v599
    // Predicated region
    $region38: #{tpu_custom_call.1} parent=1 // pred_check
      %p602 = pneg %p62
    $region39: #{tpu_custom_call.1} parent=1 // pred_check_branch
      %604 = sbr.rel (%p602) target = $region41
    $region40: #{tpu_custom_call.1} parent=1 // pred_region
      %v605 = vld [vmem:[#allocation2] sm:$0xff]
      %v606 = vld [vmem:[#allocation2 + $0x8] sm:$0xff]
      %v607 = vld [vmem:[%s4] sm:$0x1]
      %v609 = vlaneseq
      %v610 = vshrl.u32 %v609, 7
      %v611 = vsub.s32 0, %v610
      %v612 = vrot.slane %v607, %v611
      %v614 = vadd.f32 %v605, %v612
      %v615 = vadd.f32 %v606, %v612
      %616 = vst [vmem:[#allocation9] sm:$0xff] %v614
      %617 = vst [vmem:[#allocation9 + $0x8] sm:$0xff] %v615
    $region41: #{tpu_custom_call.1} parent=1 // pred_fallthru
      _
    // Predicated region
    $region42: #{tpu_custom_call.1} parent=1 // pred_check
      _
    $region43: #{tpu_custom_call.1} parent=1 // pred_check_branch
      %619 = sbr.rel (0) target = $region45
    $region44: #{tpu_custom_call.1} parent=1 // pred_region
      %s621 = ssub.s32 256, 256
      %622 = vsyncadd [#allocation5], %s621
      %s623 = sshll.u32 [#allocation9], 4
      %s624 = int_to_ptr.vmem [resolvable:$true] %s623
      %629 = dma.vmem_to_hbm [thread:$0]  %s624, 256, %s5, [#allocation5], 128, 128, 8
    $region45: #{tpu_custom_call.1} parent=1 // pred_fallthru
      _
    // Predicated region
    $region46: #{tpu_custom_call.1} parent=1 // pred_check
      _
    $region47: #{tpu_custom_call.1} parent=1 // pred_check_branch
      %631 = sbr.rel (0) target = $region49
    $region48: #{tpu_custom_call.1} parent=1 // pred_region
      %632 = dma.done [#allocation5], 256
    $region49: #{tpu_custom_call.1} parent=1 // pred_fallthru
      _
    %633 = vsyncpa [#allocation4], 1
    %634 = vsyncpa [#allocation7], 1
    %635 = vsyncpa [#allocation5], 1

</llo_original>
